<compile_context>
chip_gen: v5e
topology: v5e:2x2
jax: 0.10.0
libtpu: 0.0.40
codegen_flags: <defaults>
</compile_context>

<pallas_src>
import numpy as np
import jax
import jax.numpy as jnp
from jax.experimental import pallas as pl
from jax.experimental.pallas import tpu as pltpu


def _ydrop_kernel_hw(seed_ref, x_ref, thr_ref, inv_ref, o_ref):
    """Hardware-PRNG path (TPU): hash-free, ~4 ops/element."""
    f = pl.program_id(0)                      # feature-tile index (outer / slow)
    b = pl.program_id(1)                      # batch-tile index   (inner / fast)
    tile_id = f * pl.num_programs(1) + b      # unique per-tile stream id

    pltpu.prng_seed(seed_ref[0], tile_id)
    bits = pltpu.prng_random_bits(x_ref.shape)
    if bits.dtype != jnp.uint32:
        bits = pltpu.bitcast(bits, jnp.uint32)

    # 24-bit uniform vs. per-feature keep-probability threshold (integer compare,
    # no float convert on the per-element path).
    bits24 = (bits >> 8).astype(jnp.int32)            # in [0, 2^24)
    keep = bits24 < thr_ref[...]                      # (1, TF) broadcast over rows

    # Note: partial edge tiles read padded thr/inv values; harmless because the
    # corresponding output columns are masked on writeback (no feature reduce).
    o_ref[...] = jnp.where(keep, x_ref[...] * inv_ref[...], 0.0).astype(o_ref.dtype)


def _ydrop_kernel_sw(seed_ref, x_ref, thr_ref, inv_ref, o_ref):
    """Portable fallback (interpret mode / non-TPU): counter-based murmur3 fmix32.

    Tile id is mixed into the seed and the element counter is tile-local, so no
    global flat index is needed (no int32/uint32 overflow for huge tensors).
    The row*TF multiply is hoisted to a (TB,1) column; only the two fmix32
    multiplies remain per element.
    """
    tb, tf = x_ref.shape
    f = pl.program_id(0)
    b = pl.program_id(1)
    tile_id = f * pl.num_programs(1) + b

    seed_u = seed_ref[0].astype(jnp.uint32)
    tid_u = (tile_id + 1).astype(jnp.uint32)
    mix = (seed_u * jnp.uint32(0x9E3779B9)) ^ (tid_u * jnp.uint32(0x85EBCA6B))

    row = jax.lax.broadcasted_iota(jnp.int32, (tb, 1), 0) * tf   # (tb,1) hoisted mul
    col = jax.lax.broadcasted_iota(jnp.int32, (1, tf), 1)        # (1,tf)
    idx = (row + col).astype(jnp.uint32)                         # broadcast add

    h = idx ^ mix
    h = h ^ (h >> 16)
    h = h * jnp.uint32(0x7FEB352D)
    h = h ^ (h >> 15)
    h = h * jnp.uint32(0x846CA68B)
    h = h ^ (h >> 16)

    bits24 = (h >> 8).astype(jnp.int32)
    keep = bits24 < thr_ref[...]
    o_ref[...] = jnp.where(keep, x_ref[...] * inv_ref[...], 0.0).astype(o_ref.dtype)


def _choose_tiles(B, F, itemsize):
    """Lane-dense ~4 MiB tiles; dtype-aware row alignment; >=2 grid steps for v7x."""
    lane_cap = 8192                                  # multiple of 128
    TF = F if F <= lane_cap else lane_cap
    row_align = max(8, 32 // max(1, itemsize))       # f32: 8, bf16: 16, i8/fp8: 32
    target_bytes = 4 * 1024 * 1024
    rows = max(1, target_bytes // max(1, TF * itemsize))
    if rows >= B:
        TB = B
    else:
        TB = min(B, max(row_align, (rows // row_align) * row_align))

    # v7x has 2 TensorCores: make sure there are >= 2 grid steps so both get work.
    if pl.cdiv(B, TB) * pl.cdiv(F, TF) == 1:
        if F >= 256 and F % 256 == 0:
            TF = F // 2                              # still a multiple of 128
        elif B % (2 * row_align) == 0:
            TB = B // 2
        # else: too small / oddly shaped to split cleanly; single step is fine.
    return int(TB), int(TF)


def my_dropout_forward(x, previous, scaling, seed, training=True, use_hw_prng=None):
    """Forward pass of MyDropout (ydrop path).

    x:        (B, C, H, W)
    previous: (C, H, W)  per-feature keep probabilities (buffer)
    scaling:  (C, H, W)  per-feature scaling (buffer)
    seed:     int / int32 scalar seed for the dropout mask
    """
    if not training:
        return x  # eval mode: identity, same as the torch module

    B = x.shape[0]
    F = int(np.prod(x.shape[1:]))
    x2 = x.reshape(B, F)

    # Per-feature constants, computed once (not per tile / per element):
    #   threshold = round(keep_prob * 2^24)  (integer-domain Bernoulli, ~ulp-level
    #                                         quantization of the keep prob)
    #   inv_scal  = 1 / scaling              (hoisted reciprocal, kept in x dtype)
    prev2 = previous.reshape(1, F).astype(jnp.float32)
    scal2 = scaling.reshape(1, F).astype(jnp.float32)
    thr2 = jnp.clip(jnp.round(prev2 * float(1 << 24)), 0.0, float(1 << 24)).astype(jnp.int32)
    inv2 = (1.0 / scal2).astype(x.dtype)
    seed_arr = jnp.asarray([seed], dtype=jnp.int32)

    TB, TF = _choose_tiles(B, F, x.dtype.itemsize)
    nf, nb = pl.cdiv(F, TF), pl.cdiv(B, TB)
    grid = (nf, nb)  # batch innermost -> thr/inv block index constant across steps

    if use_hw_prng is None:
        use_hw_prng = jax.devices()[0].platform == "tpu"
    kernel = _ydrop_kernel_hw if use_hw_prng else _ydrop_kernel_sw

    # Double-buffered x + out ~= 4 * tile; raise the scoped VMEM limit so v5e's
    # 16 MiB / v7x's 32 MiB defaults don't shrink the blocks (cap below v7x's
    # 64 MiB physical VMEM).
    tile_bytes = TB * TF * x.dtype.itemsize
    vmem_limit = int(min(48 * 1024 * 1024, max(32 * 1024 * 1024, 6 * tile_bytes)))

    out2 = pl.pallas_call(
        kernel,
        out_shape=jax.ShapeDtypeStruct((B, F), x.dtype),
        grid=grid,
        in_specs=[
            pl.BlockSpec(memory_space=pltpu.MemorySpace.SMEM),    # seed (1,)
            pl.BlockSpec((TB, TF), lambda f, b: (b, f)),          # x tile
            pl.BlockSpec((1, TF), lambda f, b: (0, f)),           # keep threshold
            pl.BlockSpec((1, TF), lambda f, b: (0, f)),           # 1 / scaling
        ],
        out_specs=pl.BlockSpec((TB, TF), lambda f, b: (b, f)),
        compiler_params=pltpu.CompilerParams(
            dimension_semantics=("parallel", "parallel"),
            vmem_limit_bytes=vmem_limit),
    )(seed_arr, x2, thr2, inv2)
    return out2.reshape(x.shape)


if __name__ == "__main__":
    # MyDropout(p=0.1): buffers initialized lazily to full(1 - p) on first forward.
    p = 0.1
    base_keep = 1.0 - p

    B, C, H, W = 2, 4, 16, 16
    key = jax.random.PRNGKey(0)
    x = jax.random.normal(key, (B, C, H, W), dtype=jnp.float32)

    # Deterministic buffer init (what initialize_buffers() does on the first call).
    previous = jnp.full((C, H, W), base_keep, dtype=jnp.float32)
    scaling = jnp.full((C, H, W), base_keep, dtype=jnp.float32)

    out = my_dropout_forward(x, previous, scaling, seed=0, training=True)
    out = jax.block_until_ready(out)

    # Sanity: every output element is either 0 (dropped) or x / scaling (kept).
    scaled = x / base_keep
    ok = jnp.all(jnp.logical_or(jnp.isclose(out, 0.0),
                                jnp.isclose(out, scaled, atol=1e-5)))
    keep_frac = jnp.mean((out != 0).astype(jnp.float32))
    assert bool(ok), "output elements are neither dropped nor correctly scaled"
    assert 0.7 < float(keep_frac) < 1.0, f"keep fraction {keep_frac} implausible"

    # Eval mode is identity.
    out_eval = my_dropout_forward(x, previous, scaling, seed=0, training=False)
    assert jnp.array_equal(out_eval, x)

    print("KERNEL_OK")
</pallas_src>

<mosaic_0001>
module attributes {stable_mosaic.version = 11 : i64} {
  func.func @_ydrop_kernel_sw(%arg0: i32, %arg1: i32, %arg2: memref<1xi32, #tpu.memory_space<smem>>, %arg3: memref<2x512xf32, #tpu.memory_space<vmem>>, %arg4: memref<1x512xi32, #tpu.memory_space<vmem>>, %arg5: memref<1x512xf32, #tpu.memory_space<vmem>>, %arg6: memref<2x512xf32, #tpu.memory_space<vmem>>) attributes {dimension_semantics = [#tpu.dimension_semantics<parallel>, #tpu.dimension_semantics<parallel>], iteration_bounds = array<i64: 2, 1>, scalar_prefetch = 0 : i64, scratch_operands = 0 : i64, tpu.core_type = #tpu.core_type<tc>, window_params = [{transform_indices = @transform_0, window_bounds = array<i64: 1>}, {transform_indices = @transform_1, window_bounds = array<i64: 2, 512>}, {transform_indices = @transform_2, window_bounds = array<i64: 1, 512>}, {transform_indices = @transform_3, window_bounds = array<i64: 1, 512>}, {transform_indices = @transform_4, window_bounds = array<i64: 2, 512>}]} {
    %c1_i32 = arith.constant 1 : i32
    %0 = arith.muli %arg0, %c1_i32 : i32
    %1 = arith.addi %0, %arg1 : i32
    %c0 = arith.constant 0 : index
    %2 = memref.load %arg2[%c0] : memref<1xi32, #tpu.memory_space<smem>>
    %c1_i32_0 = arith.constant 1 : i32
    %3 = arith.addi %1, %c1_i32_0 : i32
    %c-1640531527_i32 = arith.constant -1640531527 : i32
    %4 = arith.muli %2, %c-1640531527_i32 : i32
    %c-2048144789_i32 = arith.constant -2048144789 : i32
    %5 = arith.muli %3, %c-2048144789_i32 : i32
    %6 = arith.xori %4, %5 : i32
    %7 = tpu.iota {dimensions = array<i32: 0>} : vector<2x1xi32>
    %c512_i32 = arith.constant 512 : i32
    %8 = vector.broadcast %c512_i32 : i32 to vector<2x1xi32>
    %9 = arith.muli %7, %8 : vector<2x1xi32>
    %10 = tpu.iota {dimensions = array<i32: 1>} : vector<1x512xi32>
    %11 = vector.broadcast %9 : vector<2x1xi32> to vector<2x512xi32>
    %12 = vector.broadcast %10 : vector<1x512xi32> to vector<2x512xi32>
    %13 = arith.addi %11, %12 : vector<2x512xi32>
    %14 = vector.broadcast %6 : i32 to vector<2x512xi32>
    %15 = arith.xori %13, %14 : vector<2x512xi32>
    %c16_i32 = arith.constant 16 : i32
    %16 = vector.broadcast %c16_i32 : i32 to vector<2x512xi32>
    %17 = arith.shrui %15, %16 : vector<2x512xi32>
    %18 = arith.xori %15, %17 : vector<2x512xi32>
    %c2146121005_i32 = arith.constant 2146121005 : i32
    %19 = vector.broadcast %c2146121005_i32 : i32 to vector<2x512xi32>
    %20 = arith.muli %18, %19 : vector<2x512xi32>
    %c15_i32 = arith.constant 15 : i32
    %21 = vector.broadcast %c15_i32 : i32 to vector<2x512xi32>
    %22 = arith.shrui %20, %21 : vector<2x512xi32>
    %23 = arith.xori %20, %22 : vector<2x512xi32>
    %c-2073254261_i32 = arith.constant -2073254261 : i32
    %24 = vector.broadcast %c-2073254261_i32 : i32 to vector<2x512xi32>
    %25 = arith.muli %23, %24 : vector<2x512xi32>
    %c16_i32_1 = arith.constant 16 : i32
    %26 = vector.broadcast %c16_i32_1 : i32 to vector<2x512xi32>
    %27 = arith.shrui %25, %26 : vector<2x512xi32>
    %28 = arith.xori %25, %27 : vector<2x512xi32>
    %c8_i32 = arith.constant 8 : i32
    %29 = vector.broadcast %c8_i32 : i32 to vector<2x512xi32>
    %30 = arith.shrui %28, %29 : vector<2x512xi32>
    %c0_2 = arith.constant 0 : index
    %c0_3 = arith.constant 0 : index
    %31 = vector.load %arg4[%c0_2, %c0_3] : memref<1x512xi32, #tpu.memory_space<vmem>>, vector<1x512xi32>
    %32 = vector.broadcast %31 : vector<1x512xi32> to vector<2x512xi32>
    %33 = arith.cmpi slt, %30, %32 : vector<2x512xi32>
    %c0_4 = arith.constant 0 : index
    %c0_5 = arith.constant 0 : index
    %34 = vector.load %arg3[%c0_4, %c0_5] : memref<2x512xf32, #tpu.memory_space<vmem>>, vector<2x512xf32>
    %c0_6 = arith.constant 0 : index
    %c0_7 = arith.constant 0 : index
    %35 = vector.load %arg5[%c0_6, %c0_7] : memref<1x512xf32, #tpu.memory_space<vmem>>, vector<1x512xf32>
    %36 = vector.broadcast %35 : vector<1x512xf32> to vector<2x512xf32>
    %37 = arith.mulf %34, %36 : vector<2x512xf32>
    %cst = arith.constant 0.000000e+00 : f32
    %38 = vector.broadcast %cst : f32 to vector<2x512xf32>
    %39 = arith.select %33, %37, %38 : vector<2x512xi1>, vector<2x512xf32>
    %c0_8 = arith.constant 0 : index
    %c0_9 = arith.constant 0 : index
    %40 = vector.load %arg6[%c0_8, %c0_9] : memref<2x512xf32, #tpu.memory_space<vmem>>, vector<2x512xf32>
    tpu.vector_store %arg6[%c0_8, %c0_9], %39 {strides = array<i32>} : memref<2x512xf32, #tpu.memory_space<vmem>>, vector<2x512xf32>,
    return
  }
  func.func @transform_0(%arg0: i32, %arg1: i32) -> i32 {
    %c0_i32 = arith.constant 0 : i32
    %c0_i32_0 = arith.constant 0 : i32
    return %c0_i32 : i32
  }
  func.func @transform_1(%arg0: i32, %arg1: i32) -> (i32, i32) {
    %c0_i32 = arith.constant 0 : i32
    return %arg1, %arg0 : i32, i32
  }
  func.func @transform_2(%arg0: i32, %arg1: i32) -> (i32, i32) {
    %c0_i32 = arith.constant 0 : i32
    %c0_i32_0 = arith.constant 0 : i32
    return %c0_i32, %arg0 : i32, i32
  }
  func.func @transform_3(%arg0: i32, %arg1: i32) -> (i32, i32) {
    %c0_i32 = arith.constant 0 : i32
    %c0_i32_0 = arith.constant 0 : i32
    return %c0_i32, %arg0 : i32, i32
  }
  func.func @transform_4(%arg0: i32, %arg1: i32) -> (i32, i32) {
    %c0_i32 = arith.constant 0 : i32
    return %arg1, %arg0 : i32, i32
  }
}

</mosaic_0001>

<llo_original>
// kernel: tpu_custom_call.1
$region0: #{tpu_custom_call.1}
  #allocation0 [shape = 'u32[]', space=smem, size = 0x4, offset = 0x4, fixed_abs, tag = 'smem constant byte address 0x4 - core index']
  #allocation1 [shape = 'u32[72,128]{1,0:T(1,128)}', space=vmem, size = 0x9000, scoped, tag = 'internal scratch']
  #allocation2 [shape = 's32[1]{0:T(128)S(6)}', space=smem, size = 0x200, scoped, tag = 'scoped memory for tpu_custom_call.1']
  %s0 = inlined_call_operand.<no memory space> [shape: s32[1], index: 0, kind: input, shape index: {}]
  %s1 = inlined_call_operand.hbm [shape: f32[2,1024], index: 1, kind: input, shape index: {}]
  %s2 = inlined_call_operand.hbm [shape: s32[1,1024], index: 2, kind: input, shape index: {}]
  %s3 = inlined_call_operand.hbm [shape: f32[1,1024], index: 3, kind: input, shape index: {}]
  %s4 = inlined_call_operand.hbm [shape: f32[2,1024], index: 4, kind: output, shape index: {}]
  %s5 = sld [smem:[#allocation0]]
  $region61: #{tpu_custom_call.1} parent=0
    _
  %s7 = ssub.s32 1, %s5
  %s8 = scalar_select 0, %s7, %s5
  %9 = sst [smem:[#allocation2]] %s0
  $region1: #{tpu_custom_call.1} parent=0
    #allocation3 [shape = 'u8[8192]{0}', space=vmem, size = 0x2000, scoped, tag = 'input window, operand 1']
    #allocation4 [shape = 's32[2]{0}', space=sflag, size = 0x8, scoped, tag = 'scoped memory for tpu_custom_call.1']
    #allocation5 [shape = 's32[2]{0}', space=sflag, size = 0x8, scoped, tag = 'scoped memory for tpu_custom_call.1']
    #allocation6 [shape = 'u8[4096]{0}', space=vmem, size = 0x1000, scoped, tag = 'input window, operand 2']
    #allocation7 [shape = 's32[2]{0}', space=sflag, size = 0x8, scoped, tag = 'scoped memory for tpu_custom_call.1']
    #allocation8 [shape = 'u8[4096]{0}', space=vmem, size = 0x1000, scoped, tag = 'input window, operand 3']
    #allocation9 [shape = 'u8[8192]{0}', space=vmem, size = 0x2000, scoped, tag = 'output window, operand 0']
    %10 = vsyncpa [#allocation4], 0
    %s11 = scalar_lea.sflag [#allocation4], 1
    %12 = vsyncpa %s11, 0
    %13 = vsyncpa [#allocation7], 0
    %s14 = scalar_lea.sflag [#allocation7], 1
    %15 = vsyncpa %s14, 0
    %16 = vsyncpa [#allocation5], 0
    %s17 = scalar_lea.sflag [#allocation5], 1
    %18 = vsyncpa %s17, 0
    loop: start=0, step=1, limit=4
    $region2: #{tpu_custom_call.1} parent=1 // loop_pre_header
      _
    $region3: #{tpu_custom_call.1} parent=1 // loop_header
      %s20 = sphi 0, %s24
      %p21 = scmp.ge.s32.totalorder %s20, 4
      %s27 = sphi 0, %s39
      %s28 = sphi 0, %s35
      %s29 = sphi 0, %s27
      %s30 = sphi 0, %s28
      %s31 = sphi 0, %s29
      %s32 = sphi 0, %s30
      %s40 = sphi 0, %s40
      %s42 = sphi 0, %s40
      %s43 = sphi 0, %s42
      %s57 = sphi 0, %s43
      %s65 = sphi 0, %s67
      %s68 = sphi 0, %s65
      %s69 = sphi 0, %s68
      %s85 = sphi 0, %s69
      %s91 = sphi 0, %s93
      %s94 = sphi 0, %s91
      %s95 = sphi 0, %s94
      %s111 = sphi 0, %s95
      %s117 = sphi 0, %s119
      %s120 = sphi 0, %s117
      %s121 = sphi 0, %s120
      %s137 = sphi 0, %s121
      %s145 = sphi 0, %s147
      %s148 = sphi 0, %s145
      %s149 = sphi 0, %s148
      %s165 = sphi 0, %s149
    $region4: #{tpu_custom_call.1} parent=1 // loop_header_branch
      %23 = sbr.rel (%p21) target = $region8
    $region5: #{tpu_custom_call.1} parent=1 // loop_body
      %s25 = ssub.s32 %s20, 1
      %s26 = ssub.s32 %s20, 2
      %s33 = sadd.s32 1, %s28
      %p34 = scmp.ge.s32.totalorder %s33, 1
      %s35 = scalar_select %p34, 0, %s33
      %s36 = sadd.s32 1, %s27
      %s37 = scalar_select %p34, %s36, %s27
      %p38 = scmp.ge.s32.totalorder %s37, 2
      %s39 = scalar_select %p38, 0, %s37
      %s41 = sadd.s32 %s40, 1
      %p44 = scmp.eq.s32.totalorder %s20, 1
      %p45 = scmp.ne.s32.totalorder %s40, %s42
      %p46 = scmp.eq.s32.totalorder %s20, 0
      %p47 = por %p45, %p46
      %p48 = scmp.ne.s32.totalorder %s40, %s42
      %p49 = scmp.eq.s32.totalorder %s25, 1
      %p50 = por %p48, %p49
      %p51 = scmp.ne.s32.totalorder %s42, %s43
      %p52 = scmp.eq.s32.totalorder %s25, 0
      %p53 = por %p51, %p52
      %p54 = scmp.ne.s32.totalorder %s42, %s43
      %p55 = scmp.eq.s32.totalorder %s26, 1
      %p56 = por %p54, %p55
      %p58 = scmp.ne.s32.totalorder %s43, %s57
      %p59 = scmp.eq.s32.totalorder %s26, 0
      %p60 = por %p58, %p59
      %s61 = ssub.s32 %s28, %s35
      %s62 = ssub.s32 %s27, %s39
      %s63 = sor.u32 %s61, %s62
      %p64 = scmp.eq.s32.totalorder %s63, 0
      %s66 = sadd.s32 %s65, 1
      %s67 = scalar_select %p64, %s65, %s66
      %p70 = pneg %p64
      %p71 = scmp.eq.s32.totalorder %s20, 1
      %p72 = por %p70, %p71
      %p73 = scmp.ne.s32.totalorder %s65, %s68
      %p74 = scmp.eq.s32.totalorder %s20, 0
      %p75 = por %p73, %p74
      %p76 = scmp.ne.s32.totalorder %s65, %s68
      %p77 = scmp.eq.s32.totalorder %s25, 1
      %p78 = por %p76, %p77
      %p79 = scmp.ne.s32.totalorder %s68, %s69
      %p80 = scmp.eq.s32.totalorder %s25, 0
      %p81 = por %p79, %p80
      %p82 = scmp.ne.s32.totalorder %s68, %s69
      %p83 = scmp.eq.s32.totalorder %s26, 1
      %p84 = por %p82, %p83
      %p86 = scmp.ne.s32.totalorder %s69, %s85
      %p87 = scmp.eq.s32.totalorder %s26, 0
      %p88 = por %p86, %p87
      %s89 = ssub.s32 %s27, %s39
      %p90 = scmp.eq.s32.totalorder %s89, 0
      %s92 = sadd.s32 %s91, 1
      %s93 = scalar_select %p90, %s91, %s92
      %p96 = pneg %p90
      %p97 = scmp.eq.s32.totalorder %s20, 1
      %p98 = por %p96, %p97
      %p99 = scmp.ne.s32.totalorder %s91, %s94
      %p100 = scmp.eq.s32.totalorder %s20, 0
      %p101 = por %p99, %p100
      %p102 = scmp.ne.s32.totalorder %s91, %s94
      %p103 = scmp.eq.s32.totalorder %s25, 1
      %p104 = por %p102, %p103
      %p105 = scmp.ne.s32.totalorder %s94, %s95
      %p106 = scmp.eq.s32.totalorder %s25, 0
      %p107 = por %p105, %p106
      %p108 = scmp.ne.s32.totalorder %s94, %s95
      %p109 = scmp.eq.s32.totalorder %s26, 1
      %p110 = por %p108, %p109
      %p112 = scmp.ne.s32.totalorder %s95, %s111
      %p113 = scmp.eq.s32.totalorder %s26, 0
      %p114 = por %p112, %p113
      %s115 = ssub.s32 %s27, %s39
      %p116 = scmp.eq.s32.totalorder %s115, 0
      %s118 = sadd.s32 %s117, 1
      %s119 = scalar_select %p116, %s117, %s118
      %p122 = pneg %p116
      %p123 = scmp.eq.s32.totalorder %s20, 1
      %p124 = por %p122, %p123
      %p125 = scmp.ne.s32.totalorder %s117, %s120
      %p126 = scmp.eq.s32.totalorder %s20, 0
      %p127 = por %p125, %p126
      %p128 = scmp.ne.s32.totalorder %s117, %s120
      %p129 = scmp.eq.s32.totalorder %s25, 1
      %p130 = por %p128, %p129
      %p131 = scmp.ne.s32.totalorder %s120, %s121
      %p132 = scmp.eq.s32.totalorder %s25, 0
      %p133 = por %p131, %p132
      %p134 = scmp.ne.s32.totalorder %s120, %s121
      %p135 = scmp.eq.s32.totalorder %s26, 1
      %p136 = por %p134, %p135
      %p138 = scmp.ne.s32.totalorder %s121, %s137
      %p139 = scmp.eq.s32.totalorder %s26, 0
      %p140 = por %p138, %p139
      %s141 = ssub.s32 %s28, %s35
      %s142 = ssub.s32 %s27, %s39
      %s143 = sor.u32 %s141, %s142
      %p144 = scmp.eq.s32.totalorder %s143, 0
      %s146 = sadd.s32 %s145, 1
      %s147 = scalar_select %p144, %s145, %s146
      %p150 = pneg %p144
      %p151 = scmp.eq.s32.totalorder %s20, 1
      %p152 = por %p150, %p151
      %p153 = scmp.ne.s32.totalorder %s145, %s148
      %p154 = scmp.eq.s32.totalorder %s20, 0
      %p155 = por %p153, %p154
      %p156 = scmp.ne.s32.totalorder %s145, %s148
      %p157 = scmp.eq.s32.totalorder %s25, 1
      %p158 = por %p156, %p157
      %p159 = scmp.ne.s32.totalorder %s148, %s149
      %p160 = scmp.eq.s32.totalorder %s25, 0
      %p161 = por %p159, %p160
      %p162 = scmp.ne.s32.totalorder %s148, %s149
      %p163 = scmp.eq.s32.totalorder %s26, 1
      %p164 = por %p162, %p163
      %p166 = scmp.ne.s32.totalorder %s149, %s165
      %p167 = scmp.eq.s32.totalorder %s26, 0
      %p168 = por %p166, %p167
      %p169 = scmp.le.s32.totalorder 1, %s20
      %p170 = scmp.lt.s32.totalorder %s20, 3
      %p171 = pnand %p169, %p170
      %p172 = pneg %p171
      // Predicated region
      $region9: #{tpu_custom_call.1} parent=5 // pred_check
        _
      $region10: #{tpu_custom_call.1} parent=5 // pred_check_branch
        %174 = sbr.rel (%p171) target = $region12
      $region11: #{tpu_custom_call.1} parent=5 // pred_region
        %s175 = ssub.s32 %s20, 1
        // Predicated region
        $region13: #{tpu_custom_call.1} parent=11 // pred_check
          %p176 = pneg %p53
        $region14: #{tpu_custom_call.1} parent=11 // pred_check_branch
          %178 = sbr.rel (%p176) target = $region16
        $region15: #{tpu_custom_call.1} parent=11 // pred_region
          _
        $region16: #{tpu_custom_call.1} parent=11 // pred_fallthru
          _
      $region12: #{tpu_custom_call.1} parent=5 // pred_fallthru
        _
      %p179 = scmp.lt.s32.totalorder %s20, 2
      // Predicated region
      $region17: #{tpu_custom_call.1} parent=5 // pred_check
        %p180 = pneg %p179
      $region18: #{tpu_custom_call.1} parent=5 // pred_check_branch
        %182 = sbr.rel (%p180) target = $region20
      $region19: #{tpu_custom_call.1} parent=5 // pred_region
        // Predicated region
        $region21: #{tpu_custom_call.1} parent=19 // pred_check
          %p183 = pneg %p75
        $region22: #{tpu_custom_call.1} parent=19 // pred_check_branch
          %185 = sbr.rel (%p183) target = $region24
        $region23: #{tpu_custom_call.1} parent=19 // pred_region
          %s186 = sand.u32 %s65, 1
          %s187 = scalar_lea.sflag [#allocation4], %s186
          %s188 = sand.u32 %s65, 1
          %s189 = smul.addr %s188, 8
          %s190 = scalar_lea.vmem [#allocation3], %s189
          %s191 = smul.u32 4, %s27
          %193 = vsyncadd %s187, 0
          %s194 = smul.addr %s28, 8
          %s195 = sadd.s32 %s191, %s194
          %s196 = smul.addr %s195, 2
          %s197 = scalar_lea.hbm %s1, %s196
          %s199 = sshll.u32 %s197, 4
          %s200 = int_to_ptr.hbm [resolvable:$true] %s199
          %s201 = sshll.u32 %s190, 4
          %s202 = int_to_ptr.vmem [resolvable:$true] %s201
          %204 = dma.hbm_to_vmem [thread:$0]  %s200, 128, %s202, %s187
        $region24: #{tpu_custom_call.1} parent=19 // pred_fallthru
          _
        // Predicated region
        $region25: #{tpu_custom_call.1} parent=19 // pred_check
          %p205 = pneg %p101
        $region26: #{tpu_custom_call.1} parent=19 // pred_check_branch
          %207 = sbr.rel (%p205) target = $region28
        $region27: #{tpu_custom_call.1} parent=19 // pred_region
          %s208 = sand.u32 %s20, 1
          %s209 = scalar_lea.sflag [#allocation7], %s208
          %s210 = sand.u32 %s91, 1
          %s211 = smul.addr %s210, 4
          %s212 = scalar_lea.vmem [#allocation6], %s211
          %s213 = smul.u32 4, %s27
          %215 = vsyncadd %s209, 0
          %s216 = scalar_lea.hbm %s2, %s213
          %s218 = sshll.u32 %s216, 4
          %s219 = int_to_ptr.hbm [resolvable:$true] %s218
          %s220 = sshll.u32 %s212, 4
          %s221 = int_to_ptr.vmem [resolvable:$true] %s220
          %223 = dma.hbm_to_vmem [thread:$0]  %s219, 64, %s221, %s209
        $region28: #{tpu_custom_call.1} parent=19 // pred_fallthru
          _
        // Predicated region
        $region29: #{tpu_custom_call.1} parent=19 // pred_check
          %p224 = pneg %p127
        $region30: #{tpu_custom_call.1} parent=19 // pred_check_branch
          %226 = sbr.rel (%p224) target = $region32
        $region31: #{tpu_custom_call.1} parent=19 // pred_region
          %s227 = sand.u32 %s20, 1
          %s228 = scalar_lea.sflag [#allocation7], %s227
          %s229 = sand.u32 %s117, 1
          %s230 = smul.addr %s229, 4
          %s231 = scalar_lea.vmem [#allocation8], %s230
          %s232 = smul.u32 4, %s27
          %234 = vsyncadd %s228, 0
          %s235 = scalar_lea.hbm %s3, %s232
          %s237 = sshll.u32 %s235, 4
          %s238 = int_to_ptr.hbm [resolvable:$true] %s237
          %s239 = sshll.u32 %s231, 4
          %s240 = int_to_ptr.vmem [resolvable:$true] %s239
          %242 = dma.hbm_to_vmem [thread:$0]  %s238, 64, %s240, %s228
        $region32: #{tpu_custom_call.1} parent=19 // pred_fallthru
          _
      $region20: #{tpu_custom_call.1} parent=5 // pred_fallthru
        _
      %p243 = scmp.le.s32.totalorder 1, %s20
      %p244 = scmp.lt.s32.totalorder %s20, 3
      %p245 = pnand %p243, %p244
      %p246 = pneg %p245
      // Predicated region
      $region33: #{tpu_custom_call.1} parent=5 // pred_check
        _
      $region34: #{tpu_custom_call.1} parent=5 // pred_check_branch
        %248 = sbr.rel (%p245) target = $region36
      $region35: #{tpu_custom_call.1} parent=5 // pred_region
        %s249 = ssub.s32 %s20, 1
        %s250 = sand.u32 %s68, 1
        %s251 = scalar_lea.sflag [#allocation4], %s250
        %s252 = sand.u32 %s68, 1
        %s253 = smul.addr %s252, 8
        %s254 = scalar_lea.vmem [#allocation3], %s253
        // Predicated region
        $region37: #{tpu_custom_call.1} parent=35 // pred_check
          %p255 = pneg %p81
        $region38: #{tpu_custom_call.1} parent=35 // pred_check_branch
          %257 = sbr.rel (%p255) target = $region40
        $region39: #{tpu_custom_call.1} parent=35 // pred_region
          %259 = dma.done %s251, 128
        $region40: #{tpu_custom_call.1} parent=35 // pred_fallthru
          _
        %s260 = sand.u32 %s25, 1
        %s261 = scalar_lea.sflag [#allocation7], %s260
        %s262 = sand.u32 %s94, 1
        %s263 = smul.addr %s262, 4
        %s264 = scalar_lea.vmem [#allocation6], %s263
        // Predicated region
        $region41: #{tpu_custom_call.1} parent=35 // pred_check
          %p265 = pneg %p107
        $region42: #{tpu_custom_call.1} parent=35 // pred_check_branch
          %267 = sbr.rel (%p265) target = $region44
        $region43: #{tpu_custom_call.1} parent=35 // pred_region
          %269 = dma.done %s261, 64
        $region44: #{tpu_custom_call.1} parent=35 // pred_fallthru
          _
        %s270 = sand.u32 %s25, 1
        %s271 = scalar_lea.sflag [#allocation7], %s270
        %s272 = sand.u32 %s120, 1
        %s273 = smul.addr %s272, 4
        %s274 = scalar_lea.vmem [#allocation8], %s273
        // Predicated region
        $region45: #{tpu_custom_call.1} parent=35 // pred_check
          %p275 = pneg %p133
        $region46: #{tpu_custom_call.1} parent=35 // pred_check_branch
          %277 = sbr.rel (%p275) target = $region48
        $region47: #{tpu_custom_call.1} parent=35 // pred_region
          %279 = dma.done %s271, 64
        $region48: #{tpu_custom_call.1} parent=35 // pred_fallthru
          _
        %p280 = pneg %p53
        %p281 = pneg %p50
        %s282 = sand.u32 %s68, 1
        %s283 = scalar_lea.sflag [#allocation4], %s282
        %s284 = sand.u32 %s68, 1
        %s285 = smul.addr %s284, 8
        %s286 = scalar_lea.vmem [#allocation3], %s285
        %p287 = pneg %p81
        %p288 = pneg %p78
        %s289 = sand.u32 %s25, 1
        %s290 = scalar_lea.sflag [#allocation7], %s289
        %s291 = sand.u32 %s94, 1
        %s292 = smul.addr %s291, 4
        %s293 = scalar_lea.vmem [#allocation6], %s292
        %p294 = pneg %p107
        %p295 = pneg %p104
        %s296 = sand.u32 %s25, 1
        %s297 = scalar_lea.sflag [#allocation7], %s296
        %s298 = sand.u32 %s120, 1
        %s299 = smul.addr %s298, 4
        %s300 = scalar_lea.vmem [#allocation8], %s299
        %p301 = pneg %p133
        %p302 = pneg %p130
        %p303 = pneg %p161
        %p304 = pneg %p158
        %s305 = sand.u32 %s148, 1
        %s306 = scalar_lea.sflag [#allocation5], %s305
        %s307 = sand.u32 %s148, 1
        %s308 = smul.addr %s307, 8
        %s309 = scalar_lea.vmem [#allocation9], %s308
        %s310 = smul.u32 4, %s29
        %s311 = smul.u32 4, %s29
        %s312 = smul.u32 4, %s29
        %s313 = smul.u32 4, %s29
        %s314 = sadd.s32 %s29, %s30
        %s315 = sld [smem:[#allocation2]]
        %s316 = sadd.s32 %s314, 1
        %s317 = smul.u32 %s315, 2654435769
        %s318 = smul.u32 %s316, 2246822507
        %s319 = sxor.u32 %s317, %s318
        %v320 = vlaneseq
        %v321 = vshrl.u32 %v320, 7
        %v322 = vmul.u32 %v321, 512
        %v323 = vlaneseq
        %v324 = vand.u32 %v323, 127
        %v325 = vadd.s32 %v324, 128
        %v326 = vadd.s32 %v324, 256
        %v327 = vadd.s32 %v324, 384
        %v328 = vadd.s32 %v322, %v324
        %v329 = vadd.s32 %v322, %v325
        %v330 = vadd.s32 %v322, %v326
        %v331 = vadd.s32 %v322, %v327
        %v332 = vstv %s319
        %v333 = vxor.u32 %v328, %v332
        %v334 = vxor.u32 %v329, %v332
        %v335 = vxor.u32 %v330, %v332
        %v336 = vxor.u32 %v331, %v332
        %v337 = vshrl.u32 %v333, 16
        %v338 = vshrl.u32 %v334, 16
        %v339 = vshrl.u32 %v335, 16
        %v340 = vshrl.u32 %v336, 16
        %v341 = vxor.u32 %v333, %v337
        %v342 = vxor.u32 %v334, %v338
        %v343 = vxor.u32 %v335, %v339
        %v344 = vxor.u32 %v336, %v340
        %v345 = vmul.u32 %v341, 2146121005
        %v346 = vmul.u32 %v342, 2146121005
        %v347 = vmul.u32 %v343, 2146121005
        %v348 = vmul.u32 %v344, 2146121005
        %v349 = vshrl.u32 %v345, 15
        %v350 = vshrl.u32 %v346, 15
        %v351 = vshrl.u32 %v347, 15
        %v352 = vshrl.u32 %v348, 15
        %v353 = vxor.u32 %v345, %v349
        %v354 = vxor.u32 %v346, %v350
        %v355 = vxor.u32 %v347, %v351
        %v356 = vxor.u32 %v348, %v352
        %v357 = vmul.u32 %v353, 2221713035
        %v358 = vmul.u32 %v354, 2221713035
        %v359 = vmul.u32 %v355, 2221713035
        %v360 = vmul.u32 %v356, 2221713035
        %v361 = vshrl.u32 %v357, 16
        %v362 = vshrl.u32 %v358, 16
        %v363 = vshrl.u32 %v359, 16
        %v364 = vshrl.u32 %v360, 16
        %v365 = vxor.u32 %v357, %v361
        %v366 = vxor.u32 %v358, %v362
        %v367 = vxor.u32 %v359, %v363
        %v368 = vxor.u32 %v360, %v364
        %v369 = vshrl.u32 %v365, 8
        %v370 = vshrl.u32 %v366, 8
        %v371 = vshrl.u32 %v367, 8
        %v372 = vshrl.u32 %v368, 8
        %v373 = vld [vmem:[%s264] sm:$0xf]
        %v374 = vperm.slane %v373, 0
        %v375 = vperm.slane %v373, 1
        %v376 = vperm.slane %v373, 2
        %v377 = vperm.slane %v373, 3
        %vm378 = vcmp.lt.s32.totalorder %v369, %v374
        %vm379 = vcmp.lt.s32.totalorder %v370, %v375
        %vm380 = vcmp.lt.s32.totalorder %v371, %v376
        %vm381 = vcmp.lt.s32.totalorder %v372, %v377
        %v382 = vld [vmem:[%s254] sm:$0xff]
        %v383 = vld [vmem:[%s274] sm:$0xf]
        %v385 = vperm.slane %v383, 0
        %v386 = vperm.slane %v383, 1
        %v387 = vperm.slane %v383, 2
        %v388 = vperm.slane %v383, 3
        %v389 = vrot.slane %v386, 6
        %v390 = vrot.slane %v387, 4
        %v391 = vrot.slane %v388, 2
        %vm392 = vcmask 1041408
        %v393 = vsel %vm392, %v385, %v389
        %vm394 = vcmask 1045508
        %v395 = vsel %vm394, %v390, %v391
        %vm396 = vcmask 1043456
        %v397 = vsel %vm396, %v393, %v395
        %v399 = vmul.f32 %v382, %v397
        %401 = vst [vmem:[#allocation1] ss:$4 sm:$0xff] %v399
        %v402 = vld.sshfl [vmem:[#allocation1] sm:$0xff pattern:$0x73625140]
        %v403 = vld.sshfl [vmem:[#allocation1 + $0x8] sm:$0xff pattern:$0x73625140]
        %v404 = vld.sshfl [vmem:[#allocation1 + $0x10] sm:$0xff pattern:$0x73625140]
        %v405 = vld.sshfl [vmem:[#allocation1 + $0x18] sm:$0xff pattern:$0x73625140]
        %v410 = vsel %vm378, %v402, 0.0
        %v411 = vsel %vm379, %v403, 0.0
        %v412 = vsel %vm380, %v404, 0.0
        %v413 = vsel %vm381, %v405, 0.0
        %v418 = vrot.slane %v411, 6
        %v419 = vrot.slane %v412, 4
        %v420 = vrot.slane %v413, 2
        %v421 = vsel %vm392, %v410, %v418
        %v422 = vsel %vm394, %v419, %v420
        %v423 = vsel %vm396, %v421, %v422
        %425 = vst [vmem:[%s309] sm:$0xff] %v423
        %s426 = sand.u32 %s148, 1
        %s427 = scalar_lea.sflag [#allocation5], %s426
        %s428 = sand.u32 %s148, 1
        %s429 = smul.addr %s428, 8
        %s430 = scalar_lea.vmem [#allocation9], %s429
        // Predicated region
        $region49: #{tpu_custom_call.1} parent=35 // pred_check
          %p431 = pneg %p158
        $region50: #{tpu_custom_call.1} parent=35 // pred_check_branch
          %433 = sbr.rel (%p431) target = $region52
        $region51: #{tpu_custom_call.1} parent=35 // pred_region
          %s434 = smul.u32 4, %s29
          %436 = vsyncadd %s427, 0
          %s437 = smul.addr %s30, 8
          %s438 = sadd.s32 %s434, %s437
          %s439 = smul.addr %s438, 2
          %s440 = scalar_lea.hbm %s4, %s439
          %s442 = sshll.u32 %s430, 4
          %s443 = int_to_ptr.vmem [resolvable:$true] %s442
          %s444 = sshll.u32 %s440, 4
          %s445 = int_to_ptr.hbm [resolvable:$true] %s444
          %447 = dma.vmem_to_hbm [thread:$0]  %s443, 128, %s445, %s427
        $region52: #{tpu_custom_call.1} parent=35 // pred_fallthru
          _
      $region36: #{tpu_custom_call.1} parent=5 // pred_fallthru
        _
      %p448 = scmp.le.s32.totalorder 2, %s20
      // Predicated region
      $region53: #{tpu_custom_call.1} parent=5 // pred_check
        %p449 = pneg %p448
      $region54: #{tpu_custom_call.1} parent=5 // pred_check_branch
        %451 = sbr.rel (%p449) target = $region56
      $region55: #{tpu_custom_call.1} parent=5 // pred_region
        %s452 = ssub.s32 %s20, 2
        // Predicated region
        $region57: #{tpu_custom_call.1} parent=55 // pred_check
          %p453 = pneg %p164
        $region58: #{tpu_custom_call.1} parent=55 // pred_check_branch
          %455 = sbr.rel (%p453) target = $region60
        $region59: #{tpu_custom_call.1} parent=55 // pred_region
          %s456 = sand.u32 %s149, 1
          %s457 = scalar_lea.sflag [#allocation5], %s456
          %s458 = sand.u32 %s149, 1
          %s459 = smul.addr %s458, 8
          %s460 = scalar_lea.vmem [#allocation9], %s459
          %462 = dma.done %s457, 128
        $region60: #{tpu_custom_call.1} parent=55 // pred_fallthru
          _
      $region56: #{tpu_custom_call.1} parent=5 // pred_fallthru
        _
    $region6: #{tpu_custom_call.1} parent=1 // loop_footer
      %s24 = sadd.s32 1, %s20
    $region7: #{tpu_custom_call.1} parent=1 // loop_footer_branch
      %19 = sbr.rel target = $region3
    $region8: #{tpu_custom_call.1} parent=1 // loop_exit
      _
    %463 = vsyncpa [#allocation4], 1
    %s464 = scalar_lea.sflag [#allocation4], 1
    %465 = vsyncpa %s464, 1
    %466 = vsyncpa [#allocation7], 1
    %s467 = scalar_lea.sflag [#allocation7], 1
    %468 = vsyncpa %s467, 1
    %469 = vsyncpa [#allocation5], 1
    %s470 = scalar_lea.sflag [#allocation5], 1
    %471 = vsyncpa %s470, 1

</llo_original>
